<compile_context>
chip_gen: v6e
topology: v6e:2x2x1
jax: 0.10.0
libtpu: 0.0.40
codegen_flags: <defaults>
</compile_context>

<pallas_src>
import functools
import math

import jax
import jax.numpy as jnp
from jax import lax
from jax.experimental import pallas as pl
from jax.experimental.pallas import tpu as pltpu

HIDDEN1 = 128       # first hidden width (lane-native)
HIDDEN2 = 64        # second hidden width in the PyTorch module
HIDDEN2_PAD = 128   # zero-padded to a full 128-lane width (weights resident)
TM_MAX = 1024       # max batch-tile rows per grid step


def _round_up(n, m):
    return ((n + m - 1) // m) * m


def _gelu_exact(x):
    # PyTorch nn.GELU() default: exact erf formulation (kept in f32).
    return 0.5 * x * (1.0 + lax.erf(x * jnp.float32(1.0 / math.sqrt(2.0))))


def _gelu_tanh(x):
    # tanh approximation: one EUP transcendental instead of an erf polynomial.
    c = jnp.float32(math.sqrt(2.0 / math.pi))
    return 0.5 * x * (1.0 + jnp.tanh(c * (x + jnp.float32(0.044715) * x * x * x)))


def _choose_tm(batch, tm_max):
    """Batch tile: minimize padding; keep >=2 grid steps once the batch is big
    enough to split across v7x's two TensorCores."""
    if batch <= 8:
        return 8
    n_steps = pl.cdiv(batch, tm_max)
    if n_steps < 2 and batch >= 256:
        n_steps = 2                       # megacore split on v7x
    return _round_up(pl.cdiv(batch, n_steps), 8)


def _pad_params(params, use_bf16):
    """Zero-pad hidden-2 to 128 lanes; weights optionally bf16, biases f32."""
    in_dim = params["w1"].shape[0]
    out_dim = params["w3"].shape[1]
    wdt = jnp.bfloat16 if use_bf16 else jnp.float32

    w1 = params["w1"].astype(wdt)                                   # (in, 128)
    b1 = params["b1"].astype(jnp.float32)                           # (1, 128)

    w2 = jnp.zeros((HIDDEN1, HIDDEN2_PAD), wdt).at[:, :HIDDEN2].set(
        params["w2"].astype(wdt))                                   # (128, 128)
    b2 = jnp.zeros((1, HIDDEN2_PAD), jnp.float32).at[:, :HIDDEN2].set(
        params["b2"].astype(jnp.float32))                           # (1, 128)

    w3 = jnp.zeros((HIDDEN2_PAD, out_dim), wdt).at[:HIDDEN2, :].set(
        params["w3"].astype(wdt))                                   # (128, out)
    b3 = params["b3"].astype(jnp.float32)                           # (1, out)

    return w1, b1, w2, b2, w3, b3, in_dim, out_dim


def _qnetwork_kernel(gelu, x_ref, w1_ref, b1_ref, w2_ref, b2_ref, w3_ref,
                     b3_ref, o_ref):
    # x:(TM,in) @ w1:(in,128) -> GELU -> @ w2:(128,128) -> GELU -> @ w3:(128,out)
    wdt = w1_ref.dtype
    x = x_ref[...].astype(wdt)                       # cast in-kernel (VPU, cheap)
    h1 = jnp.dot(x, w1_ref[...], preferred_element_type=jnp.float32) + b1_ref[...]
    h1 = gelu(h1)
    h2 = jnp.dot(h1.astype(wdt), w2_ref[...],
                 preferred_element_type=jnp.float32) + b2_ref[...]
    h2 = gelu(h2)
    out = jnp.dot(h2.astype(wdt), w3_ref[...],
                  preferred_element_type=jnp.float32) + b3_ref[...]
    o_ref[...] = out.astype(o_ref.dtype)


def qnetwork_forward(x, params, *, use_bf16=True, use_approx_gelu=False,
                     tm_max=TM_MAX):
    """x: (B, input_dim). Returns (B, output_dim) float32."""
    B = x.shape[0]
    w1, b1, w2, b2, w3, b3, in_dim, out_dim = _pad_params(params, use_bf16)

    tm = _choose_tm(B, tm_max)
    b_pad = _round_up(B, tm)
    if b_pad == B:
        xp = x                                       # no pad pass over x
    else:
        xp = jnp.zeros((b_pad, in_dim), x.dtype).at[:B, :].set(x)
    grid = (b_pad // tm,)

    flops = 2 * b_pad * (in_dim * HIDDEN1 + HIDDEN1 * HIDDEN2_PAD
                         + HIDDEN2_PAD * out_dim)
    bytes_accessed = (
        xp.size * xp.dtype.itemsize
        + sum(a.size * a.dtype.itemsize for a in (w1, b1, w2, b2, w3, b3))
        + b_pad * out_dim * 4)
    cost = pl.CostEstimate(flops=flops,
                           transcendentals=b_pad * (HIDDEN1 + HIDDEN2_PAD),
                           bytes_accessed=bytes_accessed)

    gelu = _gelu_tanh if use_approx_gelu else _gelu_exact
    kernel = functools.partial(_qnetwork_kernel, gelu)

    out = pl.pallas_call(
        kernel,
        out_shape=jax.ShapeDtypeStruct((b_pad, out_dim), jnp.float32),
        grid=grid,
        in_specs=[
            pl.BlockSpec((tm, in_dim), lambda i: (i, 0)),        # x tile (pipelined)
            pl.BlockSpec((in_dim, HIDDEN1), lambda i: (0, 0)),   # weights resident
            pl.BlockSpec((1, HIDDEN1), lambda i: (0, 0)),
            pl.BlockSpec((HIDDEN1, HIDDEN2_PAD), lambda i: (0, 0)),
            pl.BlockSpec((1, HIDDEN2_PAD), lambda i: (0, 0)),
            pl.BlockSpec((HIDDEN2_PAD, out_dim), lambda i: (0, 0)),
            pl.BlockSpec((1, out_dim), lambda i: (0, 0)),
        ],
        out_specs=pl.BlockSpec((tm, out_dim), lambda i: (i, 0)),  # (B_pad, out) direct
        compiler_params=pltpu.CompilerParams(
            dimension_semantics=("parallel",),       # batch splits across TCs (v7x)
        ),
        cost_estimate=cost,
    )(xp, w1, b1, w2, b2, w3, b3)

    return out[:B] if b_pad != B else out


# ----------------------------- init + reference ------------------------------

def _kaiming_uniform(key, out_features, in_features):
    # Matches nn.init.kaiming_uniform_(weight, nonlinearity='relu'):
    # gain = sqrt(2), bound = gain * sqrt(3 / fan_in). PyTorch weight is
    # (out, in); transpose to (in, out) for the kernel.
    gain = math.sqrt(2.0)
    bound = gain * math.sqrt(3.0 / in_features)
    w = jax.random.uniform(key, (out_features, in_features),
                           minval=-bound, maxval=bound, dtype=jnp.float32)
    return w.T  # (in, out)


def _bias_uniform(key, out_features):
    # Matches nn.init.uniform_(bias, -0.1, 0.1).
    b = jax.random.uniform(key, (out_features,), minval=-0.1, maxval=0.1,
                           dtype=jnp.float32)
    return b.reshape(1, out_features)


def init_qnetwork_params(key, input_dim, output_dim):
    k = jax.random.split(key, 6)
    return {
        "w1": _kaiming_uniform(k[0], 128, input_dim),
        "b1": _bias_uniform(k[1], 128),
        "w2": _kaiming_uniform(k[2], 64, 128),
        "b2": _bias_uniform(k[3], 64),
        "w3": _kaiming_uniform(k[4], output_dim, 64),
        "b3": _bias_uniform(k[5], output_dim),
    }


def qnetwork_reference(x, params):
    h1 = _gelu_exact(x @ params["w1"] + params["b1"])
    h2 = _gelu_exact(h1 @ params["w2"] + params["b2"])
    return h2 @ params["w3"] + params["b3"]


if __name__ == "__main__":
    key = jax.random.PRNGKey(0)
    k_params, k_x1, k_x2 = jax.random.split(key, 3)

    input_dim, output_dim = 16, 4
    params = init_qnetwork_params(k_params, input_dim, output_dim)

    fwd = jax.jit(qnetwork_forward,
                  static_argnames=("use_bf16", "use_approx_gelu", "tm_max"))

    # Small batch (single grid step), exact f32 path vs. reference.
    x_small = jax.random.normal(k_x1, (8, input_dim), dtype=jnp.float32)
    ref_small = qnetwork_reference(x_small, params)
    out_f32 = jax.block_until_ready(fwd(x_small, params, use_bf16=False))
    assert out_f32.shape == (8, output_dim)
    assert jnp.allclose(out_f32, ref_small, atol=1e-5, rtol=1e-5)

    # Default path (bf16 MXU inputs, f32 GELU/accumulate) — looser tolerance.
    out_bf16 = jax.block_until_ready(fwd(x_small, params))
    assert jnp.allclose(out_bf16, ref_small, atol=5e-2, rtol=5e-2)

    # Ragged batch: >=2 grid steps (megacore) with minimal padding (260 -> 272).
    x_big = jax.random.normal(k_x2, (260, input_dim), dtype=jnp.float32)
    ref_big = qnetwork_reference(x_big, params)
    out_big_f32 = jax.block_until_ready(fwd(x_big, params, use_bf16=False))
    assert out_big_f32.shape == (260, output_dim)
    assert jnp.allclose(out_big_f32, ref_big, atol=1e-5, rtol=1e-5)

    out_big = jax.block_until_ready(fwd(x_big, params))
    assert jnp.allclose(out_big, ref_big, atol=5e-2, rtol=5e-2)

    # Optional tanh-GELU fast path (EUP) — not bit-exact with nn.GELU() default.
    out_tanh = jax.block_until_ready(fwd(x_big, params, use_approx_gelu=True))
    assert jnp.allclose(out_tanh, ref_big, atol=5e-2, rtol=5e-2)

    print("KERNEL_OK")
</pallas_src>

<mosaic_0001>
module attributes {stable_mosaic.version = 11 : i64} {
  func.func @_qnetwork_kernel(%arg0: i32, %arg1: memref<8x16xf32, #tpu.memory_space<vmem>>, %arg2: memref<16x128xf32, #tpu.memory_space<vmem>>, %arg3: memref<1x128xf32, #tpu.memory_space<vmem>>, %arg4: memref<128x128xf32, #tpu.memory_space<vmem>>, %arg5: memref<1x128xf32, #tpu.memory_space<vmem>>, %arg6: memref<128x4xf32, #tpu.memory_space<vmem>>, %arg7: memref<1x4xf32, #tpu.memory_space<vmem>>, %arg8: memref<8x4xf32, #tpu.memory_space<vmem>>) attributes {dimension_semantics = [#tpu.dimension_semantics<parallel>], iteration_bounds = array<i64: 1>, scalar_prefetch = 0 : i64, scratch_operands = 0 : i64, tpu.core_type = #tpu.core_type<tc>, window_params = [{transform_indices = @transform_0, window_bounds = array<i64: 8, 16>}, {pipeline_mode = #tpu.pipeline_mode<synchronous>, transform_indices = @transform_1, window_bounds = array<i64: 16, 128>}, {pipeline_mode = #tpu.pipeline_mode<synchronous>, transform_indices = @transform_2, window_bounds = array<i64: 1, 128>}, {pipeline_mode = #tpu.pipeline_mode<synchronous>, transform_indices = @transform_3, window_bounds = array<i64: 128, 128>}, {pipeline_mode = #tpu.pipeline_mode<synchronous>, transform_indices = @transform_4, window_bounds = array<i64: 1, 128>}, {pipeline_mode = #tpu.pipeline_mode<synchronous>, transform_indices = @transform_5, window_bounds = array<i64: 128, 4>}, {pipeline_mode = #tpu.pipeline_mode<synchronous>, transform_indices = @transform_6, window_bounds = array<i64: 1, 4>}, {transform_indices = @transform_7, window_bounds = array<i64: 8, 4>}]} {
    %c0 = arith.constant 0 : index
    %c0_0 = arith.constant 0 : index
    %0 = vector.load %arg1[%c0, %c0_0] : memref<8x16xf32, #tpu.memory_space<vmem>>, vector<8x16xf32>
    %c0_1 = arith.constant 0 : index
    %c0_2 = arith.constant 0 : index
    %1 = vector.load %arg2[%c0_1, %c0_2] : memref<16x128xf32, #tpu.memory_space<vmem>>, vector<16x128xf32>
    %cst = arith.constant dense<0.000000e+00> : vector<8x128xf32>
    %2 = tpu.matmul %0, %1, %cst {dimension_numbers = #tpu.dot_dimension_numbers<[1], [0], [0], [1], [0, 0, 1, 1], [], []>} : vector<8x16xf32>, vector<16x128xf32>, vector<8x128xf32> -> vector<8x128xf32>
    %c0_3 = arith.constant 0 : index
    %c0_4 = arith.constant 0 : index
    %3 = vector.load %arg3[%c0_3, %c0_4] : memref<1x128xf32, #tpu.memory_space<vmem>>, vector<1x128xf32>
    %4 = vector.broadcast %3 : vector<1x128xf32> to vector<8x128xf32>
    %5 = arith.addf %2, %4 : vector<8x128xf32>
    %cst_5 = arith.constant 5.000000e-01 : f32
    %6 = vector.broadcast %cst_5 : f32 to vector<8x128xf32>
    %7 = arith.mulf %6, %5 : vector<8x128xf32>
    %cst_6 = arith.constant 0.707106769 : f32
    %8 = vector.broadcast %cst_6 : f32 to vector<8x128xf32>
    %9 = arith.mulf %5, %8 : vector<8x128xf32>
    %10 = math.erf %9 : vector<8x128xf32>
    %cst_7 = arith.constant 1.000000e+00 : f32
    %11 = vector.broadcast %cst_7 : f32 to vector<8x128xf32>
    %12 = arith.addf %11, %10 : vector<8x128xf32>
    %13 = arith.mulf %7, %12 : vector<8x128xf32>
    %c0_8 = arith.constant 0 : index
    %c0_9 = arith.constant 0 : index
    %14 = vector.load %arg4[%c0_8, %c0_9] : memref<128x128xf32, #tpu.memory_space<vmem>>, vector<128x128xf32>
    %cst_10 = arith.constant dense<0.000000e+00> : vector<8x128xf32>
    %15 = tpu.matmul %13, %14, %cst_10 {dimension_numbers = #tpu.dot_dimension_numbers<[1], [0], [0], [1], [0, 0, 1, 1], [], []>} : vector<8x128xf32>, vector<128x128xf32>, vector<8x128xf32> -> vector<8x128xf32>
    %c0_11 = arith.constant 0 : index
    %c0_12 = arith.constant 0 : index
    %16 = vector.load %arg5[%c0_11, %c0_12] : memref<1x128xf32, #tpu.memory_space<vmem>>, vector<1x128xf32>
    %17 = vector.broadcast %16 : vector<1x128xf32> to vector<8x128xf32>
    %18 = arith.addf %15, %17 : vector<8x128xf32>
    %cst_13 = arith.constant 5.000000e-01 : f32
    %19 = vector.broadcast %cst_13 : f32 to vector<8x128xf32>
    %20 = arith.mulf %19, %18 : vector<8x128xf32>
    %cst_14 = arith.constant 0.707106769 : f32
    %21 = vector.broadcast %cst_14 : f32 to vector<8x128xf32>
    %22 = arith.mulf %18, %21 : vector<8x128xf32>
    %23 = math.erf %22 : vector<8x128xf32>
    %cst_15 = arith.constant 1.000000e+00 : f32
    %24 = vector.broadcast %cst_15 : f32 to vector<8x128xf32>
    %25 = arith.addf %24, %23 : vector<8x128xf32>
    %26 = arith.mulf %20, %25 : vector<8x128xf32>
    %c0_16 = arith.constant 0 : index
    %c0_17 = arith.constant 0 : index
    %27 = vector.load %arg6[%c0_16, %c0_17] : memref<128x4xf32, #tpu.memory_space<vmem>>, vector<128x4xf32>
    %cst_18 = arith.constant dense<0.000000e+00> : vector<8x4xf32>
    %28 = tpu.matmul %26, %27, %cst_18 {dimension_numbers = #tpu.dot_dimension_numbers<[1], [0], [0], [1], [0, 0, 1, 1], [], []>} : vector<8x128xf32>, vector<128x4xf32>, vector<8x4xf32> -> vector<8x4xf32>
    %c0_19 = arith.constant 0 : index
    %c0_20 = arith.constant 0 : index
    %29 = vector.load %arg7[%c0_19, %c0_20] : memref<1x4xf32, #tpu.memory_space<vmem>>, vector<1x4xf32>
    %30 = vector.broadcast %29 : vector<1x4xf32> to vector<8x4xf32>
    %31 = arith.addf %28, %30 : vector<8x4xf32>
    %c0_21 = arith.constant 0 : index
    %c0_22 = arith.constant 0 : index
    %32 = vector.load %arg8[%c0_21, %c0_22] : memref<8x4xf32, #tpu.memory_space<vmem>>, vector<8x4xf32>
    tpu.vector_store %arg8[%c0_21, %c0_22], %31 {strides = array<i32>} : memref<8x4xf32, #tpu.memory_space<vmem>>, vector<8x4xf32>,
    return
  }
  func.func @transform_0(%arg0: i32) -> (i32, i32) {
    %c0_i32 = arith.constant 0 : i32
    %c0_i32_0 = arith.constant 0 : i32
    return %arg0, %c0_i32 : i32, i32
  }
  func.func @transform_1(%arg0: i32) -> (i32, i32) {
    %c0_i32 = arith.constant 0 : i32
    %c0_i32_0 = arith.constant 0 : i32
    %c0_i32_1 = arith.constant 0 : i32
    return %c0_i32, %c0_i32_0 : i32, i32
  }
  func.func @transform_2(%arg0: i32) -> (i32, i32) {
    %c0_i32 = arith.constant 0 : i32
    %c0_i32_0 = arith.constant 0 : i32
    %c0_i32_1 = arith.constant 0 : i32
    return %c0_i32, %c0_i32_0 : i32, i32
  }
  func.func @transform_3(%arg0: i32) -> (i32, i32) {
    %c0_i32 = arith.constant 0 : i32
    %c0_i32_0 = arith.constant 0 : i32
    %c0_i32_1 = arith.constant 0 : i32
    return %c0_i32, %c0_i32_0 : i32, i32
  }
  func.func @transform_4(%arg0: i32) -> (i32, i32) {
    %c0_i32 = arith.constant 0 : i32
    %c0_i32_0 = arith.constant 0 : i32
    %c0_i32_1 = arith.constant 0 : i32
    return %c0_i32, %c0_i32_0 : i32, i32
  }
  func.func @transform_5(%arg0: i32) -> (i32, i32) {
    %c0_i32 = arith.constant 0 : i32
    %c0_i32_0 = arith.constant 0 : i32
    %c0_i32_1 = arith.constant 0 : i32
    return %c0_i32, %c0_i32_0 : i32, i32
  }
  func.func @transform_6(%arg0: i32) -> (i32, i32) {
    %c0_i32 = arith.constant 0 : i32
    %c0_i32_0 = arith.constant 0 : i32
    %c0_i32_1 = arith.constant 0 : i32
    return %c0_i32, %c0_i32_0 : i32, i32
  }
  func.func @transform_7(%arg0: i32) -> (i32, i32) {
    %c0_i32 = arith.constant 0 : i32
    %c0_i32_0 = arith.constant 0 : i32
    return %arg0, %c0_i32 : i32, i32
  }
}

</mosaic_0001>

<llo_original>
// kernel: qnetwork_forward.1
$region0: #{qnetwork_forward.1}
  #allocation0 [shape = 'u32[]', space=smem, size = 0x4, offset = 0x4, fixed_abs, tag = 'smem constant byte address 0x4 - core index']
  #allocation1 [shape = 'u32[144,128]{1,0:T(1,128)}', space=vmem, size = 0x12000, scoped, tag = 'internal scratch']
  %s0 = inlined_call_operand.vmem [shape: f32[8,16], index: 0, kind: input, shape index: {}]
  %s1 = inlined_call_operand.vmem [shape: f32[16,128], index: 1, kind: input, shape index: {}]
  %s2 = inlined_call_operand.vmem [shape: f32[1,128], index: 2, kind: input, shape index: {}]
  %s3 = inlined_call_operand.vmem [shape: f32[128,128], index: 3, kind: input, shape index: {}]
  %s4 = inlined_call_operand.vmem [shape: f32[1,128], index: 4, kind: input, shape index: {}]
  %s5 = inlined_call_operand.vmem [shape: f32[128,4], index: 5, kind: input, shape index: {}]
  %s6 = inlined_call_operand.vmem [shape: f32[1,4], index: 6, kind: input, shape index: {}]
  %s7 = inlined_call_operand.vmem [shape: f32[8,4], index: 7, kind: output, shape index: {}]
  %s8 = sld [smem:[#allocation0]]
  $region38: #{qnetwork_forward.1} parent=0
    _
  %s10 = ssub.s32 1, %s8
  %s11 = scalar_select 0, %s10, %s8
  // Predicated region
  $region2: #{qnetwork_forward.1} parent=0 // pred_check
    _
  $region3: #{qnetwork_forward.1} parent=0 // pred_check_branch
    %13 = sbr.rel (0) target = $region5
  $region4: #{qnetwork_forward.1} parent=0 // pred_region
    _
  $region5: #{qnetwork_forward.1} parent=0 // pred_fallthru
    _
  // Predicated region
  $region6: #{qnetwork_forward.1} parent=0 // pred_check
    _
  $region7: #{qnetwork_forward.1} parent=0 // pred_check_branch
    %15 = sbr.rel (0) target = $region9
  $region8: #{qnetwork_forward.1} parent=0 // pred_region
    _
  $region9: #{qnetwork_forward.1} parent=0 // pred_fallthru
    _
  // Predicated region
  $region10: #{qnetwork_forward.1} parent=0 // pred_check
    _
  $region11: #{qnetwork_forward.1} parent=0 // pred_check_branch
    %17 = sbr.rel (0) target = $region13
  $region12: #{qnetwork_forward.1} parent=0 // pred_region
    _
  $region13: #{qnetwork_forward.1} parent=0 // pred_fallthru
    _
  // Predicated region
  $region14: #{qnetwork_forward.1} parent=0 // pred_check
    _
  $region15: #{qnetwork_forward.1} parent=0 // pred_check_branch
    %19 = sbr.rel (0) target = $region17
  $region16: #{qnetwork_forward.1} parent=0 // pred_region
    _
  $region17: #{qnetwork_forward.1} parent=0 // pred_fallthru
    _
  // Predicated region
  $region18: #{qnetwork_forward.1} parent=0 // pred_check
    _
  $region19: #{qnetwork_forward.1} parent=0 // pred_check_branch
    %21 = sbr.rel (0) target = $region21
  $region20: #{qnetwork_forward.1} parent=0 // pred_region
    _
  $region21: #{qnetwork_forward.1} parent=0 // pred_fallthru
    _
  // Predicated region
  $region22: #{qnetwork_forward.1} parent=0 // pred_check
    _
  $region23: #{qnetwork_forward.1} parent=0 // pred_check_branch
    %23 = sbr.rel (0) target = $region25
  $region24: #{qnetwork_forward.1} parent=0 // pred_region
    _
  $region25: #{qnetwork_forward.1} parent=0 // pred_fallthru
    _
  // Predicated region
  $region26: #{qnetwork_forward.1} parent=0 // pred_check
    _
  $region27: #{qnetwork_forward.1} parent=0 // pred_check_branch
    %25 = sbr.rel (0) target = $region29
  $region28: #{qnetwork_forward.1} parent=0 // pred_region
    _
  $region29: #{qnetwork_forward.1} parent=0 // pred_fallthru
    _
  %v26 = vld [vmem:[%s0] sm:$0xff]
  %v27 = vld [vmem:[%s1] sm:$0xff]
  %v28 = vld [vmem:[%s1 + $0x8] sm:$0xff]
  %v29 = vld [vmem:[%s2] sm:$0x1]
  %v31 = vlaneseq
  %v32 = vshrl.u32 %v31, 7
  %v33 = vsub.s32 0, %v32
  %v34 = vrot.slane %v29, %v33
  %vm36 = vcmask 130048
  %v38 = vsel %vm36, %v26, 0
  %40 = vmatprep.subr.mxu0 0.0
  %41 = vmatpush1.msra.mxu0 0.0
  %42 = vmatprep.subr.mxu0 0.0
  %43 = vmatpush1.msra.mxu0 0.0
  %44 = vmatprep.subr.mxu0 0.0
  %45 = vmatpush1.msra.mxu0 0.0
  %46 = vmatprep.subr.mxu0 0.0
  %47 = vmatpush1.msra.mxu0 0.0
  %48 = vmatprep.subr.mxu0 0.0
  %49 = vmatpush1.msra.mxu0 0.0
  %50 = vmatprep.subr.mxu0 0.0
  %51 = vmatpush1.msra.mxu0 0.0
  %52 = vmatprep.subr.mxu0 0.0
  %53 = vmatpush1.msra.mxu0 0.0
  %54 = vmatprep.subr.mxu0 0.0
  %55 = vmatpush1.msra.mxu0 0.0
  %56 = vmatprep.subr.mxu0 0.0
  %57 = vmatpush1.msra.mxu0 0.0
  %58 = vmatprep.subr.mxu0 0.0
  %59 = vmatpush1.msra.mxu0 0.0
  %60 = vmatprep.subr.mxu0 0.0
  %61 = vmatpush1.msra.mxu0 0.0
  %62 = vmatprep.subr.mxu0 0.0
  %63 = vmatpush1.msra.mxu0 0.0
  %64 = vmatprep.subr.mxu0 0.0
  %65 = vmatpush1.msra.mxu0 0.0
  %66 = vmatprep.subr.mxu0 0.0
  %67 = vmatpush1.msra.mxu0 0.0
  %68 = vmatprep.subr.mxu0 0.0
  %69 = vmatpush1.msra.mxu0 %v28
  %70 = vmatprep.subr.mxu0 0.0
  %71 = vmatpush1.msra.mxu0 %v27
  %72 = vmatprep.subr.mxu0 0.0
  %73 = vmatpush2.msra.mxu0 0.0
  %74 = vmatprep.subr.mxu0 0.0
  %75 = vmatpush2.msra.mxu0 0.0
  %76 = vmatprep.subr.mxu0 0.0
  %77 = vmatpush2.msra.mxu0 0.0
  %78 = vmatprep.subr.mxu0 0.0
  %79 = vmatpush2.msra.mxu0 0.0
  %80 = vmatprep.subr.mxu0 0.0
  %81 = vmatpush2.msra.mxu0 0.0
  %82 = vmatprep.subr.mxu0 0.0
  %83 = vmatpush2.msra.mxu0 0.0
  %84 = vmatprep.subr.mxu0 0.0
  %85 = vmatpush2.msra.mxu0 0.0
  %86 = vmatprep.subr.mxu0 0.0
  %87 = vmatpush2.msra.mxu0 0.0
  %88 = vmatprep.subr.mxu0 0.0
  %89 = vmatpush2.msra.mxu0 0.0
  %90 = vmatprep.subr.mxu0 0.0
  %91 = vmatpush2.msra.mxu0 0.0
  %92 = vmatprep.subr.mxu0 0.0
  %93 = vmatpush2.msra.mxu0 0.0
  %94 = vmatprep.subr.mxu0 0.0
  %95 = vmatpush2.msra.mxu0 0.0
  %96 = vmatprep.subr.mxu0 0.0
  %97 = vmatpush2.msra.mxu0 0.0
  %98 = vmatprep.subr.mxu0 0.0
  %99 = vmatpush2.msra.mxu0 0.0
  %100 = vmatprep.subr.mxu0 0.0
  %101 = vmatpush2.msra.mxu0 0.0
  %102 = vmatprep.subr.mxu0 0.0
  %103 = vmatpush2.msra.mxu0 0.0
  %104 = vmatprep.mubr.f32.mxu0 0.0
  %105 = vmatmul.mubr.f32.gmra.mxu0 %v38
  %v106 = vpop.f32.mrf.mxu0
  %v107 = vadd.f32 %v34, %v106
  %v108 = vpop.f32.mrf.mxu0
  %109 = vdwg.mxu0
  %v110 = vmul.f32 %v107, 0.5
  %v111 = vmul.f32 %v107, 0.70710677
  %v112 = verf.f32.pop %v111
  %v113 = vadd.f32 %v112, 1.0
  %v114 = vmul.f32 %v110, %v113
  %v115 = vld [vmem:[%s3] sm:$0xff]
  %v116 = vld [vmem:[%s3 + $0x8] sm:$0xff]
  %v117 = vld [vmem:[%s3 + $0x10] sm:$0xff]
  %v118 = vld [vmem:[%s3 + $0x18] sm:$0xff]
  %v119 = vld [vmem:[%s3 + $0x20] sm:$0xff]
  %v120 = vld [vmem:[%s3 + $0x28] sm:$0xff]
  %v121 = vld [vmem:[%s3 + $0x30] sm:$0xff]
  %v122 = vld [vmem:[%s3 + $0x38] sm:$0xff]
  %v123 = vld [vmem:[%s3 + $0x40] sm:$0xff]
  %v124 = vld [vmem:[%s3 + $0x48] sm:$0xff]
  %v125 = vld [vmem:[%s3 + $0x50] sm:$0xff]
  %v126 = vld [vmem:[%s3 + $0x58] sm:$0xff]
  %v127 = vld [vmem:[%s3 + $0x60] sm:$0xff]
  %v128 = vld [vmem:[%s3 + $0x68] sm:$0xff]
  %v129 = vld [vmem:[%s3 + $0x70] sm:$0xff]
  %v130 = vld [vmem:[%s3 + $0x78] sm:$0xff]
  %v131 = vld [vmem:[%s4] sm:$0x1]
  %v133 = vlaneseq
  %v134 = vshrl.u32 %v133, 7
  %v135 = vsub.s32 0, %v134
  %v136 = vrot.slane %v131, %v135
  %138 = vmatprep.subr.mxu0 0.0
  %139 = vmatpush1.msra.mxu0 %v130
  %140 = vmatprep.subr.mxu0 0.0
  %141 = vmatpush1.msra.mxu0 %v129
  %142 = vmatprep.subr.mxu0 0.0
  %143 = vmatpush1.msra.mxu0 %v128
  %144 = vmatprep.subr.mxu0 0.0
  %145 = vmatpush1.msra.mxu0 %v127
  %146 = vmatprep.subr.mxu0 0.0
  %147 = vmatpush1.msra.mxu0 %v126
  %148 = vmatprep.subr.mxu0 0.0
  %149 = vmatpush1.msra.mxu0 %v125
  %150 = vmatprep.subr.mxu0 0.0
  %151 = vmatpush1.msra.mxu0 %v124
  %152 = vmatprep.subr.mxu0 0.0
  %153 = vmatpush1.msra.mxu0 %v123
  %154 = vmatprep.subr.mxu0 0.0
  %155 = vmatpush1.msra.mxu0 %v122
  %156 = vmatprep.subr.mxu0 0.0
  %157 = vmatpush1.msra.mxu0 %v121
  %158 = vmatprep.subr.mxu0 0.0
  %159 = vmatpush1.msra.mxu0 %v120
  %160 = vmatprep.subr.mxu0 0.0
  %161 = vmatpush1.msra.mxu0 %v119
  %162 = vmatprep.subr.mxu0 0.0
  %163 = vmatpush1.msra.mxu0 %v118
  %164 = vmatprep.subr.mxu0 0.0
  %165 = vmatpush1.msra.mxu0 %v117
  %166 = vmatprep.subr.mxu0 0.0
  %167 = vmatpush1.msra.mxu0 %v116
  %168 = vmatprep.subr.mxu0 0.0
  %169 = vmatpush1.msra.mxu0 %v115
  %170 = vmatprep.subr.mxu0 0.0
  %171 = vmatpush2.msra.mxu0 0.0
  %172 = vmatprep.subr.mxu0 0.0
  %173 = vmatpush2.msra.mxu0 0.0
  %174 = vmatprep.subr.mxu0 0.0
  %175 = vmatpush2.msra.mxu0 0.0
  %176 = vmatprep.subr.mxu0 0.0
  %177 = vmatpush2.msra.mxu0 0.0
  %178 = vmatprep.subr.mxu0 0.0
  %179 = vmatpush2.msra.mxu0 0.0
  %180 = vmatprep.subr.mxu0 0.0
  %181 = vmatpush2.msra.mxu0 0.0
  %182 = vmatprep.subr.mxu0 0.0
  %183 = vmatpush2.msra.mxu0 0.0
  %184 = vmatprep.subr.mxu0 0.0
  %185 = vmatpush2.msra.mxu0 0.0
  %186 = vmatprep.subr.mxu0 0.0
  %187 = vmatpush2.msra.mxu0 0.0
  %188 = vmatprep.subr.mxu0 0.0
  %189 = vmatpush2.msra.mxu0 0.0
  %190 = vmatprep.subr.mxu0 0.0
  %191 = vmatpush2.msra.mxu0 0.0
  %192 = vmatprep.subr.mxu0 0.0
  %193 = vmatpush2.msra.mxu0 0.0
  %194 = vmatprep.subr.mxu0 0.0
  %195 = vmatpush2.msra.mxu0 0.0
  %196 = vmatprep.subr.mxu0 0.0
  %197 = vmatpush2.msra.mxu0 0.0
  %198 = vmatprep.subr.mxu0 0.0
  %199 = vmatpush2.msra.mxu0 0.0
  %200 = vmatprep.subr.mxu0 0.0
  %201 = vmatpush2.msra.mxu0 0.0
  %202 = vmatprep.mubr.f32.mxu0 0.0
  %203 = vmatmul.mubr.f32.gmra.mxu0 %v114
  %v204 = vpop.f32.mrf.mxu0
  %v205 = vadd.f32 %v136, %v204
  %v206 = vpop.f32.mrf.mxu0
  %207 = vdwg.mxu0
  %v208 = vmul.f32 %v205, 0.5
  %v209 = vmul.f32 %v205, 0.70710677
  %v210 = verf.f32.pop %v209
  %v211 = vadd.f32 %v210, 1.0
  %v212 = vmul.f32 %v208, %v211
  %v213 = vld [vmem:[%s5] sm:$0xff]
  %v214 = vld [vmem:[%s5 + $0x8] sm:$0xff]
  %v215 = vld [vmem:[%s5 + $0x10] sm:$0xff]
  %v216 = vld [vmem:[%s5 + $0x18] sm:$0xff]
  %v217 = vld [vmem:[%s5 + $0x20] sm:$0xff]
  %v218 = vld [vmem:[%s5 + $0x28] sm:$0xff]
  %v219 = vld [vmem:[%s5 + $0x30] sm:$0xff]
  %v220 = vld [vmem:[%s5 + $0x38] sm:$0xff]
  %v221 = vld [vmem:[%s5 + $0x40] sm:$0xff]
  %v222 = vld [vmem:[%s5 + $0x48] sm:$0xff]
  %v223 = vld [vmem:[%s5 + $0x50] sm:$0xff]
  %v224 = vld [vmem:[%s5 + $0x58] sm:$0xff]
  %v225 = vld [vmem:[%s5 + $0x60] sm:$0xff]
  %v226 = vld [vmem:[%s5 + $0x68] sm:$0xff]
  %v227 = vld [vmem:[%s5 + $0x70] sm:$0xff]
  %v228 = vld [vmem:[%s5 + $0x78] sm:$0xff]
  %v229 = vld [vmem:[%s6] sm:$0x1]
  %v231 = vlaneseq
  %v232 = vshrl.u32 %v231, 7
  %v233 = vsub.s32 0, %v232
  %v234 = vrot.slane %v229, %v233
  %236 = vmatprep.subr.mxu0 0.0
  %237 = vmatpush1.msra.mxu0 %v228
  %238 = vmatprep.subr.mxu0 0.0
  %239 = vmatpush1.msra.mxu0 %v227
  %240 = vmatprep.subr.mxu0 0.0
  %241 = vmatpush1.msra.mxu0 %v226
  %242 = vmatprep.subr.mxu0 0.0
  %243 = vmatpush1.msra.mxu0 %v225
  %244 = vmatprep.subr.mxu0 0.0
  %245 = vmatpush1.msra.mxu0 %v224
  %246 = vmatprep.subr.mxu0 0.0
  %247 = vmatpush1.msra.mxu0 %v223
  %248 = vmatprep.subr.mxu0 0.0
  %249 = vmatpush1.msra.mxu0 %v222
  %250 = vmatprep.subr.mxu0 0.0
  %251 = vmatpush1.msra.mxu0 %v221
  %252 = vmatprep.subr.mxu0 0.0
  %253 = vmatpush1.msra.mxu0 %v220
  %254 = vmatprep.subr.mxu0 0.0
  %255 = vmatpush1.msra.mxu0 %v219
  %256 = vmatprep.subr.mxu0 0.0
  %257 = vmatpush1.msra.mxu0 %v218
  %258 = vmatprep.subr.mxu0 0.0
  %259 = vmatpush1.msra.mxu0 %v217
  %260 = vmatprep.subr.mxu0 0.0
  %261 = vmatpush1.msra.mxu0 %v216
  %262 = vmatprep.subr.mxu0 0.0
  %263 = vmatpush1.msra.mxu0 %v215
  %264 = vmatprep.subr.mxu0 0.0
  %265 = vmatpush1.msra.mxu0 %v214
  %266 = vmatprep.subr.mxu0 0.0
  %267 = vmatpush1.msra.mxu0 %v213
  %268 = vmatprep.subr.mxu0 0.0
  %269 = vmatpush2.msra.mxu0 0.0
  %270 = vmatprep.subr.mxu0 0.0
  %271 = vmatpush2.msra.mxu0 0.0
  %272 = vmatprep.subr.mxu0 0.0
  %273 = vmatpush2.msra.mxu0 0.0
  %274 = vmatprep.subr.mxu0 0.0
  %275 = vmatpush2.msra.mxu0 0.0
  %276 = vmatprep.subr.mxu0 0.0
  %277 = vmatpush2.msra.mxu0 0.0
  %278 = vmatprep.subr.mxu0 0.0
  %279 = vmatpush2.msra.mxu0 0.0
  %280 = vmatprep.subr.mxu0 0.0
  %281 = vmatpush2.msra.mxu0 0.0
  %282 = vmatprep.subr.mxu0 0.0
  %283 = vmatpush2.msra.mxu0 0.0
  %284 = vmatprep.subr.mxu0 0.0
  %285 = vmatpush2.msra.mxu0 0.0
  %286 = vmatprep.subr.mxu0 0.0
  %287 = vmatpush2.msra.mxu0 0.0
  %288 = vmatprep.subr.mxu0 0.0
  %289 = vmatpush2.msra.mxu0 0.0
  %290 = vmatprep.subr.mxu0 0.0
  %291 = vmatpush2.msra.mxu0 0.0
  %292 = vmatprep.subr.mxu0 0.0
  %293 = vmatpush2.msra.mxu0 0.0
  %294 = vmatprep.subr.mxu0 0.0
  %295 = vmatpush2.msra.mxu0 0.0
  %296 = vmatprep.subr.mxu0 0.0
  %297 = vmatpush2.msra.mxu0 0.0
  %298 = vmatprep.subr.mxu0 0.0
  %299 = vmatpush2.msra.mxu0 0.0
  %300 = vmatprep.mubr.f32.mxu0 0.0
  %301 = vmatmul.mubr.f32.gmra.mxu0 %v212
  %v302 = vpop.f32.mrf.mxu0
  %v303 = vadd.f32 %v234, %v302
  %v304 = vpop.f32.mrf.mxu0
  %305 = vdwg.mxu0
  %vm306 = vcmask 31744
  %307 = vst.msk [vmem:[%s7] sm:$0xff] %vm306, %v303
  // Predicated region
  $region30: #{qnetwork_forward.1} parent=0 // pred_check
    _
  $region31: #{qnetwork_forward.1} parent=0 // pred_check_branch
    %309 = sbr.rel (0) target = $region33
  $region32: #{qnetwork_forward.1} parent=0 // pred_region
    _
  $region33: #{qnetwork_forward.1} parent=0 // pred_fallthru
    _
  // Predicated region
  $region34: #{qnetwork_forward.1} parent=0 // pred_check
    _
  $region35: #{qnetwork_forward.1} parent=0 // pred_check_branch
    %311 = sbr.rel (0) target = $region37
  $region36: #{qnetwork_forward.1} parent=0 // pred_region
    _
  $region37: #{qnetwork_forward.1} parent=0 // pred_fallthru
    _

</llo_original>
